<compile_context>
chip_gen: v6e
topology: v6e:2x2x1
jax: 0.10.0
libtpu: 0.0.40
codegen_flags: <defaults>
</compile_context>

<pallas_src>
import math
import jax
import jax.numpy as jnp
from jax.experimental import pallas as pl
from jax.experimental.pallas import tpu as pltpu


def _sc_embed_kernel(x_ref, w_ref, posb_ref, o_ref):
    # x_ref:    (TB, feature_size)        raw (unpadded) rows for this batch block
    # w_ref:    (feature_size, NP*D)      block-diagonal projection weight (resident)
    # posb_ref: (1, NP*D)                 position embeddings + bias, flattened (resident)
    # o_ref:    (TB, NP*D)                lane-dense output block
    proj = jnp.dot(x_ref[...], w_ref[...],
                   preferred_element_type=jnp.float32)          # MXU: (TB, NP*D)
    o_ref[...] = (proj + posb_ref[...]).astype(o_ref.dtype)     # single VPU add (broadcast)


def sc_embeddings_forward(seq_values, proj_weight, proj_bias, pos_embeddings,
                          *, patch_size, block_b=1024):
    """seq_values:     (B, feature_size) f32
       proj_weight:    (d_model, patch_size)   (PyTorch nn.Linear layout)
       proj_bias:      (d_model,)
       pos_embeddings: (1, num_patches, d_model)
       returns:        (B, num_patches, d_model) f32
    """
    B, feature_size = seq_values.shape
    d_model = proj_weight.shape[0]
    num_patches = math.ceil(feature_size / patch_size)
    padded = num_patches * patch_size
    npd = num_patches * d_model

    # --- parameter prep (constant per model; ideally hoisted to init) -------------------
    # Block-diagonal weight: BigW[n*PS + k, n*D + d] = W.T[k, d]; truncate padded rows
    # (the zero-padded input columns they would multiply contribute nothing).
    w_t = proj_weight.T.astype(jnp.float32)                          # (PS, D)
    big_w = jnp.kron(jnp.eye(num_patches, dtype=jnp.float32), w_t)   # (padded, NP*D)
    big_w = big_w[:feature_size]                                     # (feature_size, NP*D)

    # Fold bias into position embeddings, flatten lane-dense.
    pos_b = (pos_embeddings.reshape(num_patches, d_model).astype(jnp.float32)
             + proj_bias.astype(jnp.float32)[None, :]).reshape(1, npd)

    # --- batch blocking ------------------------------------------------------------------
    tb = min(block_b, B)
    if tb < B:
        tb = max(8, (tb // 8) * 8)       # partial-B blocks must keep sublane divisibility
    grid = (pl.cdiv(B, tb),)

    out_flat = pl.pallas_call(
        _sc_embed_kernel,
        out_shape=jax.ShapeDtypeStruct((B, npd), jnp.float32),
        grid_spec=pl.GridSpec(
            grid=grid,
            in_specs=[
                pl.BlockSpec((tb, feature_size), lambda i: (i, 0)),
                pl.BlockSpec((feature_size, npd), lambda i: (0, 0)),
                pl.BlockSpec((1, npd), lambda i: (0, 0)),
            ],
            out_specs=pl.BlockSpec((tb, npd), lambda i: (i, 0)),
        ),
        compiler_params=pltpu.CompilerParams(
            dimension_semantics=("parallel",),
            # ~2.7 MB working set at tb=1024 (double-buffered); comfortably under the
            # 16 MiB v5e / 32 MiB v6e-v7x scoped-VMEM defaults, so no explicit limit needed.
        ),
    )(seq_values.astype(jnp.float32), big_w, pos_b)

    # Contiguous (row-major) reshape — metadata only, no extra HBM traffic.
    return out_flat.reshape(B, num_patches, d_model)


if __name__ == "__main__":
    # small shapes consistent with the module
    feature_size = 100
    patch_size = 16
    d_model = 32
    batch = 2
    num_patches = math.ceil(feature_size / patch_size)   # 7 (pad_size = 12)

    key = jax.random.PRNGKey(0)
    k_x, k_w, k_b, k_pos, k_cls = jax.random.split(key, 5)

    seq_values = jax.random.normal(k_x, (batch, feature_size), dtype=jnp.float32)
    proj_weight = jax.random.normal(k_w, (d_model, patch_size), dtype=jnp.float32) * 0.1
    proj_bias = jax.random.normal(k_b, (d_model,), dtype=jnp.float32) * 0.1
    pos_embeddings = jax.random.normal(k_pos, (1, num_patches, d_model), dtype=jnp.float32)
    cls_token = jax.random.normal(k_cls, (1, 1, d_model), dtype=jnp.float32)  # unused in forward

    out = sc_embeddings_forward(seq_values, proj_weight, proj_bias, pos_embeddings,
                                patch_size=patch_size)
    out = jax.block_until_ready(out)

    # plain-JAX reference (pad + reshape + Linear + pos) for sanity
    pad = num_patches * patch_size - feature_size
    xr = jnp.pad(seq_values, ((0, 0), (0, pad))).reshape(batch, num_patches, patch_size)
    ref = xr @ proj_weight.T + proj_bias + pos_embeddings
    assert out.shape == (batch, num_patches, d_model)
    assert jnp.allclose(out, ref, atol=1e-5, rtol=1e-5)

    print("KERNEL_OK")
</pallas_src>

<mosaic_0001>
module attributes {stable_mosaic.version = 11 : i64} {
  func.func @_sc_embed_kernel(%arg0: i32, %arg1: memref<2x100xf32, #tpu.memory_space<vmem>>, %arg2: memref<100x224xf32, #tpu.memory_space<vmem>>, %arg3: memref<1x224xf32, #tpu.memory_space<vmem>>, %arg4: memref<2x224xf32, #tpu.memory_space<vmem>>) attributes {dimension_semantics = [#tpu.dimension_semantics<parallel>], iteration_bounds = array<i64: 1>, scalar_prefetch = 0 : i64, scratch_operands = 0 : i64, tpu.core_type = #tpu.core_type<tc>, window_params = [{transform_indices = @transform_0, window_bounds = array<i64: 2, 100>}, {pipeline_mode = #tpu.pipeline_mode<synchronous>, transform_indices = @transform_1, window_bounds = array<i64: 100, 224>}, {pipeline_mode = #tpu.pipeline_mode<synchronous>, transform_indices = @transform_2, window_bounds = array<i64: 1, 224>}, {transform_indices = @transform_3, window_bounds = array<i64: 2, 224>}]} {
    %c0 = arith.constant 0 : index
    %c0_0 = arith.constant 0 : index
    %0 = vector.load %arg1[%c0, %c0_0] : memref<2x100xf32, #tpu.memory_space<vmem>>, vector<2x100xf32>
    %c0_1 = arith.constant 0 : index
    %c0_2 = arith.constant 0 : index
    %1 = vector.load %arg2[%c0_1, %c0_2] : memref<100x224xf32, #tpu.memory_space<vmem>>, vector<100x224xf32>
    %cst = arith.constant dense<0.000000e+00> : vector<2x224xf32>
    %2 = tpu.matmul %0, %1, %cst {dimension_numbers = #tpu.dot_dimension_numbers<[1], [0], [0], [1], [0, 0, 1, 1], [], []>} : vector<2x100xf32>, vector<100x224xf32>, vector<2x224xf32> -> vector<2x224xf32>
    %c0_3 = arith.constant 0 : index
    %c0_4 = arith.constant 0 : index
    %3 = vector.load %arg3[%c0_3, %c0_4] : memref<1x224xf32, #tpu.memory_space<vmem>>, vector<1x224xf32>
    %4 = vector.broadcast %3 : vector<1x224xf32> to vector<2x224xf32>
    %5 = arith.addf %2, %4 : vector<2x224xf32>
    %c0_5 = arith.constant 0 : index
    %c0_6 = arith.constant 0 : index
    %6 = vector.load %arg4[%c0_5, %c0_6] : memref<2x224xf32, #tpu.memory_space<vmem>>, vector<2x224xf32>
    tpu.vector_store %arg4[%c0_5, %c0_6], %5 {strides = array<i32>} : memref<2x224xf32, #tpu.memory_space<vmem>>, vector<2x224xf32>,
    return
  }
  func.func @transform_0(%arg0: i32) -> (i32, i32) {
    %c0_i32 = arith.constant 0 : i32
    %c0_i32_0 = arith.constant 0 : i32
    return %arg0, %c0_i32 : i32, i32
  }
  func.func @transform_1(%arg0: i32) -> (i32, i32) {
    %c0_i32 = arith.constant 0 : i32
    %c0_i32_0 = arith.constant 0 : i32
    %c0_i32_1 = arith.constant 0 : i32
    return %c0_i32, %c0_i32_0 : i32, i32
  }
  func.func @transform_2(%arg0: i32) -> (i32, i32) {
    %c0_i32 = arith.constant 0 : i32
    %c0_i32_0 = arith.constant 0 : i32
    %c0_i32_1 = arith.constant 0 : i32
    return %c0_i32, %c0_i32_0 : i32, i32
  }
  func.func @transform_3(%arg0: i32) -> (i32, i32) {
    %c0_i32 = arith.constant 0 : i32
    %c0_i32_0 = arith.constant 0 : i32
    return %arg0, %c0_i32 : i32, i32
  }
}

</mosaic_0001>

<llo_original>
// kernel: tpu_custom_call.1
$region0: #{tpu_custom_call.1}
  #allocation0 [shape = 'u32[]', space=smem, size = 0x4, offset = 0x4, fixed_abs, tag = 'smem constant byte address 0x4 - core index']
  #allocation1 [shape = 'u32[144,128]{1,0:T(1,128)}', space=vmem, size = 0x12000, scoped, tag = 'internal scratch']
  %s0 = inlined_call_operand.hbm [shape: f32[2,100], index: 0, kind: input, shape index: {}]
  %s1 = inlined_call_operand.hbm [shape: f32[100,224], index: 1, kind: input, shape index: {}]
  %s2 = inlined_call_operand.vmem [shape: f32[1,224], index: 2, kind: input, shape index: {}]
  %s3 = inlined_call_operand.hbm [shape: f32[2,224], index: 3, kind: output, shape index: {}]
  %s4 = sld [smem:[#allocation0]]
  $region30: #{tpu_custom_call.1} parent=0
    _
  %s6 = ssub.s32 1, %s4
  %s7 = scalar_select 0, %s6, %s4
  $region1: #{tpu_custom_call.1} parent=0
    #allocation2 [shape = 'u8[1024]{0}', space=vmem, size = 0x400, scoped, tag = 'input window, operand 0, single buffered']
    #allocation3 [shape = 's32[1]{0}', space=sflag, size = 0x4, scoped, tag = 'scoped memory for tpu_custom_call.1']
    #allocation4 [shape = 's32[1]{0}', space=sflag, size = 0x4, scoped, tag = 'scoped memory for tpu_custom_call.1']
    #allocation5 [shape = 'u8[106496]{0}', space=vmem, size = 0x1a000, scoped, tag = 'input window, operand 1, single buffered']
    #allocation6 [shape = 's32[1]{0}', space=sflag, size = 0x4, scoped, tag = 'scoped memory for tpu_custom_call.1']
    #allocation7 [shape = 'u8[2048]{0}', space=vmem, size = 0x800, scoped, tag = 'output window, operand 0, single buffered']
    %8 = vsyncpa [#allocation3], 0
    %9 = vsyncpa [#allocation6], 0
    %10 = vsyncpa [#allocation4], 0
    // Predicated region
    $region2: #{tpu_custom_call.1} parent=1 // pred_check
      _
    $region3: #{tpu_custom_call.1} parent=1 // pred_check_branch
      %12 = sbr.rel (0) target = $region5
    $region4: #{tpu_custom_call.1} parent=1 // pred_region
      %s14 = ssub.s32 32, 32
      %15 = vsyncadd [#allocation3], %s14
      %s17 = sshll.u32 [#allocation2], 4
      %s18 = int_to_ptr.vmem [resolvable:$true] %s17
      %20 = dma.hbm_to_vmem [thread:$0]  %s0, 32, %s18, [#allocation3]
    $region5: #{tpu_custom_call.1} parent=1 // pred_fallthru
      _
    // Predicated region
    $region6: #{tpu_custom_call.1} parent=1 // pred_check
      _
    $region7: #{tpu_custom_call.1} parent=1 // pred_check_branch
      %22 = sbr.rel (0) target = $region9
    $region8: #{tpu_custom_call.1} parent=1 // pred_region
      %s24 = ssub.s32 3328, 3328
      %25 = vsyncadd [#allocation6], %s24
      %s26 = sshll.u32 [#allocation5], 4
      %s27 = int_to_ptr.vmem [resolvable:$true] %s26
      %32 = dma.hbm_to_vmem [thread:$0]  %s1, 3328, %s27, [#allocation6], 256, 256, 16
    $region9: #{tpu_custom_call.1} parent=1 // pred_fallthru
      _
    // Predicated region
    $region10: #{tpu_custom_call.1} parent=1 // pred_check
      _
    $region11: #{tpu_custom_call.1} parent=1 // pred_check_branch
      %34 = sbr.rel (0) target = $region13
    $region12: #{tpu_custom_call.1} parent=1 // pred_region
      _
    $region13: #{tpu_custom_call.1} parent=1 // pred_fallthru
      _
    // Predicated region
    $region14: #{tpu_custom_call.1} parent=1 // pred_check
      _
    $region15: #{tpu_custom_call.1} parent=1 // pred_check_branch
      %36 = sbr.rel (0) target = $region17
    $region16: #{tpu_custom_call.1} parent=1 // pred_region
      %37 = dma.done [#allocation3], 32
    $region17: #{tpu_custom_call.1} parent=1 // pred_fallthru
      _
    // Predicated region
    $region18: #{tpu_custom_call.1} parent=1 // pred_check
      _
    $region19: #{tpu_custom_call.1} parent=1 // pred_check_branch
      %39 = sbr.rel (0) target = $region21
    $region20: #{tpu_custom_call.1} parent=1 // pred_region
      %40 = dma.done [#allocation6], 3328
    $region21: #{tpu_custom_call.1} parent=1 // pred_fallthru
      _
    %v41 = vld [vmem:[#allocation2] sm:$0x3]
    %v42 = vld [vmem:[#allocation5] sm:$0xff]
    %v43 = vld [vmem:[#allocation5 + $0x8] sm:$0xff]
    %v44 = vld [vmem:[#allocation5 + $0x10] sm:$0xff]
    %v45 = vld [vmem:[#allocation5 + $0x18] sm:$0xff]
    %v46 = vld [vmem:[#allocation5 + $0x20] sm:$0xff]
    %v47 = vld [vmem:[#allocation5 + $0x28] sm:$0xff]
    %v48 = vld [vmem:[#allocation5 + $0x30] sm:$0xff]
    %v49 = vld [vmem:[#allocation5 + $0x38] sm:$0xff]
    %v50 = vld [vmem:[#allocation5 + $0x40] sm:$0xff]
    %v51 = vld [vmem:[#allocation5 + $0x48] sm:$0xff]
    %v52 = vld [vmem:[#allocation5 + $0x50] sm:$0xff]
    %v53 = vld [vmem:[#allocation5 + $0x58] sm:$0xff]
    %v54 = vld [vmem:[#allocation5 + $0x60] sm:$0xff]
    %v55 = vld [vmem:[#allocation5 + $0x68] sm:$0xff]
    %v56 = vld [vmem:[#allocation5 + $0x70] sm:$0xff]
    %v57 = vld [vmem:[#allocation5 + $0x78] sm:$0xff]
    %v58 = vld [vmem:[#allocation5 + $0x80] sm:$0xff]
    %v59 = vld [vmem:[#allocation5 + $0x88] sm:$0xff]
    %v60 = vld [vmem:[#allocation5 + $0x90] sm:$0xff]
    %v61 = vld [vmem:[#allocation5 + $0x98] sm:$0xff]
    %v62 = vld [vmem:[#allocation5 + $0xa0] sm:$0xff]
    %v63 = vld [vmem:[#allocation5 + $0xa8] sm:$0xff]
    %v64 = vld [vmem:[#allocation5 + $0xb0] sm:$0xff]
    %v65 = vld [vmem:[#allocation5 + $0xb8] sm:$0xff]
    %v66 = vld [vmem:[#allocation5 + $0xc0] sm:$0xf]
    %v67 = vld [vmem:[#allocation5 + $0xc8] sm:$0xf]
    %v68 = vld [vmem:[%s2] sm:$0x3]
    %v70 = vlaneseq
    %v71 = vshrl.u32 %v70, 7
    %v72 = vsub.s32 0, %v71
    %v73 = vrot.slane %v68, %v72
    %v74 = vlaneseq
    %v75 = vshrl.u32 %v74, 7
    %v76 = vsub.s32 1, %v75
    %v77 = vrot.slane %v68, %v76
    %vm80 = vcmask 818176
    %v82 = vsel %vm80, %v41, 0
    %vm84 = vcmask 1043456
    %v86 = vsel %vm84, %v66, 0
    %v89 = vsel %vm84, %v67, 0
    %91 = vmatprep.subr.mxu0 0.0
    %92 = vmatpush1.msra.mxu0 0.0
    %93 = vmatprep.subr.mxu0 0.0
    %94 = vmatpush1.msra.mxu0 0.0
    %95 = vmatprep.subr.mxu0 0.0
    %96 = vmatpush1.msra.mxu0 0.0
    %97 = vmatprep.subr.mxu0 %v89
    %98 = vmatpush1.msra.mxu0 %v86
    %99 = vmatprep.subr.mxu0 %v65
    %100 = vmatpush1.msra.mxu0 %v64
    %101 = vmatprep.subr.mxu0 %v63
    %102 = vmatpush1.msra.mxu0 %v62
    %103 = vmatprep.subr.mxu0 %v61
    %104 = vmatpush1.msra.mxu0 %v60
    %105 = vmatprep.subr.mxu0 %v59
    %106 = vmatpush1.msra.mxu0 %v58
    %107 = vmatprep.subr.mxu0 %v57
    %108 = vmatpush1.msra.mxu0 %v56
    %109 = vmatprep.subr.mxu0 %v55
    %110 = vmatpush1.msra.mxu0 %v54
    %111 = vmatprep.subr.mxu0 %v53
    %112 = vmatpush1.msra.mxu0 %v52
    %113 = vmatprep.subr.mxu0 %v51
    %114 = vmatpush1.msra.mxu0 %v50
    %115 = vmatprep.subr.mxu0 %v49
    %116 = vmatpush1.msra.mxu0 %v48
    %117 = vmatprep.subr.mxu0 %v47
    %118 = vmatpush1.msra.mxu0 %v46
    %119 = vmatprep.subr.mxu0 %v45
    %120 = vmatpush1.msra.mxu0 %v44
    %121 = vmatprep.subr.mxu0 %v43
    %122 = vmatpush1.msra.mxu0 %v42
    %123 = vmatprep.subr.mxu0 0.0
    %124 = vmatpush2.msra.mxu0 0.0
    %125 = vmatprep.subr.mxu0 0.0
    %126 = vmatpush2.msra.mxu0 0.0
    %127 = vmatprep.subr.mxu0 0.0
    %128 = vmatpush2.msra.mxu0 0.0
    %129 = vmatprep.subr.mxu0 0.0
    %130 = vmatpush2.msra.mxu0 0.0
    %131 = vmatprep.subr.mxu0 0.0
    %132 = vmatpush2.msra.mxu0 0.0
    %133 = vmatprep.subr.mxu0 0.0
    %134 = vmatpush2.msra.mxu0 0.0
    %135 = vmatprep.subr.mxu0 0.0
    %136 = vmatpush2.msra.mxu0 0.0
    %137 = vmatprep.subr.mxu0 0.0
    %138 = vmatpush2.msra.mxu0 0.0
    %139 = vmatprep.subr.mxu0 0.0
    %140 = vmatpush2.msra.mxu0 0.0
    %141 = vmatprep.subr.mxu0 0.0
    %142 = vmatpush2.msra.mxu0 0.0
    %143 = vmatprep.subr.mxu0 0.0
    %144 = vmatpush2.msra.mxu0 0.0
    %145 = vmatprep.subr.mxu0 0.0
    %146 = vmatpush2.msra.mxu0 0.0
    %147 = vmatprep.subr.mxu0 0.0
    %148 = vmatpush2.msra.mxu0 0.0
    %149 = vmatprep.subr.mxu0 0.0
    %150 = vmatpush2.msra.mxu0 0.0
    %151 = vmatprep.subr.mxu0 0.0
    %152 = vmatpush2.msra.mxu0 0.0
    %153 = vmatprep.subr.mxu0 0.0
    %154 = vmatpush2.msra.mxu0 0.0
    %155 = vmatprep.mubr.f32.mxu0 0.0
    %156 = vmatmul.mubr.f32.gmra.mxu0 %v82
    %v157 = vpop.f32.mrf.mxu0
    %v158 = vadd.f32 %v73, %v157
    %v159 = vpop.f32.mrf.mxu0
    %v160 = vadd.f32 %v77, %v159
    %161 = vdwg.mxu0
    %v164 = vcombine.low %v158, %v160
    %v166 = vunpack.c.l.s4 1983009808
    %v167 = vunpack.c.0.s8 %v166
    %v168 = vlaneseq
    %v169 = vshrl.u32 %v168, 7
    %v170 = vsub.s32 %v167, %v169
    %v171 = vrot.slane %v164, %v170
    %vm173 = vcmask 1041408
    %vm174 = vcmask 781314
    %vm175 = vmor %vm174, %vm173
    %176 = vst.msk [vmem:[#allocation7] sm:$0xf] %vm175, %v171
    // Predicated region
    $region22: #{tpu_custom_call.1} parent=1 // pred_check
      _
    $region23: #{tpu_custom_call.1} parent=1 // pred_check_branch
      %178 = sbr.rel (0) target = $region25
    $region24: #{tpu_custom_call.1} parent=1 // pred_region
      %s180 = ssub.s32 64, 64
      %181 = vsyncadd [#allocation4], %s180
      %s183 = sshll.u32 [#allocation7], 4
      %s184 = int_to_ptr.vmem [resolvable:$true] %s183
      %186 = dma.vmem_to_hbm [thread:$0]  %s184, 64, %s3, [#allocation4]
    $region25: #{tpu_custom_call.1} parent=1 // pred_fallthru
      _
    // Predicated region
    $region26: #{tpu_custom_call.1} parent=1 // pred_check
      _
    $region27: #{tpu_custom_call.1} parent=1 // pred_check_branch
      %188 = sbr.rel (0) target = $region29
    $region28: #{tpu_custom_call.1} parent=1 // pred_region
      %189 = dma.done [#allocation4], 64
    $region29: #{tpu_custom_call.1} parent=1 // pred_fallthru
      _
    %190 = vsyncpa [#allocation3], 1
    %191 = vsyncpa [#allocation6], 1
    %192 = vsyncpa [#allocation4], 1

</llo_original>
